<compile_context>
chip_gen: v7x
topology: tpu7x:2x2x1
jax: 0.10.0
libtpu: 0.0.40
codegen_flags: <defaults>
</compile_context>

<pallas_src>
import jax
import jax.numpy as jnp
from jax.experimental import pallas as pl
from jax.experimental.pallas import tpu as pltpu


def _round_up(x, m):
    return (x + m - 1) // m * m


def mpo_critic_kernel(x_ref, w_sa_ref, b_sa_ref, w1_ref, b1_ref,
                      w2_ref, b2_ref, wq_ref, bq_ref, out_ref):
    cdt = w_sa_ref.dtype                       # MXU operand dtype (bf16)
    x = x_ref[...].astype(cdt)                 # (D_in, TB), batch on lanes

    # Fused net_state / net_action: block-diagonal W_sa @ [state; action] + [bs; ba]
    h = jnp.dot(w_sa_ref[...], x, preferred_element_type=jnp.float32)
    h = jnp.maximum(h + b_sa_ref[...], 0.0)    # (2*IL, TB), f32 == cat([hs, ha])

    # net_layer1
    h1 = jnp.dot(w1_ref[...], h.astype(cdt), preferred_element_type=jnp.float32)
    h1 = jnp.maximum(h1 + b1_ref[...], 0.0)    # (H, TB)

    # net_layer2
    h2 = jnp.dot(w2_ref[...], h1.astype(cdt), preferred_element_type=jnp.float32)
    h2 = jnp.maximum(h2 + b2_ref[...], 0.0)    # (H, TB)

    # q_value: N=1 projection as VPU mul + sublane reduce (skip the MXU round
    # trip).  Elementwise math stays f32.
    wq = wq_ref[...].astype(jnp.float32)       # (H, 1)
    q = jnp.sum(h2 * wq, axis=0, keepdims=True) + bq_ref[...]   # (1, TB)
    out_ref[...] = q.astype(out_ref.dtype)


def mpo_critic_forward(state, action, kparams, *, batch_tile=512):
    B = state.shape[0]
    x = jnp.concatenate([state, action], axis=-1)        # (B, D_in) cheap XLA concat
    D_in = x.shape[-1]

    # Pad batch to a lane-aligned tile; batch goes on the lane dimension.
    B_lane = _round_up(B, 128)
    TB = min(batch_tile, B_lane)
    B_pad = _round_up(B_lane, TB)
    if B_pad != B:
        x = jnp.pad(x, ((0, B_pad - B), (0, 0)))
    x_t = x.T                                            # (D_in, B_pad)

    w_sa, b_sa = kparams["w_sa_t"], kparams["b_sa"]
    w1, b1 = kparams["w1_t"], kparams["b1"]
    w2, b2 = kparams["w2_t"], kparams["b2"]
    wq, bq = kparams["wq"], kparams["bq"]
    IL2, H = w_sa.shape[0], w1.shape[0]

    grid = (B_pad // TB,)
    const = lambda i: (0, 0)                             # weights stay VMEM-resident

    flops = 2 * B_pad * (D_in * IL2 + IL2 * H + H * H + H)
    bytes_accessed = (x_t.size * 4 + B_pad * 4
                      + sum(int(p.size) * p.dtype.itemsize
                            for p in (w_sa, b_sa, w1, b1, w2, b2, wq, bq)))

    out = pl.pallas_call(
        mpo_critic_kernel,
        out_shape=jax.ShapeDtypeStruct((1, B_pad), jnp.float32),
        grid_spec=pltpu.PrefetchScalarGridSpec(
            num_scalar_prefetch=0,
            grid=grid,
            in_specs=[
                pl.BlockSpec((D_in, TB), lambda i: (0, i)),     # batch-tiled input
                pl.BlockSpec(w_sa.shape, const),
                pl.BlockSpec(b_sa.shape, const),
                pl.BlockSpec(w1.shape, const),
                pl.BlockSpec(b1.shape, const),
                pl.BlockSpec(w2.shape, const),
                pl.BlockSpec(b2.shape, const),
                pl.BlockSpec(wq.shape, const),
                pl.BlockSpec(bq.shape, const),
            ],
            out_specs=pl.BlockSpec((1, TB), lambda i: (0, i)),  # lane-dense store
        ),
        compiler_params=pltpu.CompilerParams(
            dimension_semantics=("parallel",)),
        cost_estimate=pl.CostEstimate(flops=flops, transcendentals=0,
                                      bytes_accessed=bytes_accessed),
    )(x_t, w_sa, b_sa, w1, b1, w2, b2, wq, bq)

    return out.T[:B]                                     # (B, 1)


# ---------------------------------------------------------------------------
# Parameter construction (torch-equivalent init) + pure-JAX reference.
# ---------------------------------------------------------------------------

def xavier_normal(key, fan_in, fan_out):
    std = (2.0 / (fan_in + fan_out)) ** 0.5
    return std * jax.random.normal(key, (fan_in, fan_out), dtype=jnp.float32)


def linear_bias(key, fan_in, fan_out):
    # torch.nn.Linear default bias init: U(-1/sqrt(fan_in), 1/sqrt(fan_in))
    bound = 1.0 / (fan_in ** 0.5)
    return jax.random.uniform(key, (fan_out,), dtype=jnp.float32,
                              minval=-bound, maxval=bound)


def make_params(key, state_dim, action_dim, input_layer, critic_hidden,
                compute_dtype=jnp.bfloat16):
    ks = jax.random.split(key, 10)
    # Torch-layout (in, out) f32 parameters (module semantics / reference).
    ref = {
        "ws": xavier_normal(ks[0], state_dim, input_layer),
        "bs": linear_bias(ks[1], state_dim, input_layer),
        "wa": xavier_normal(ks[2], action_dim, input_layer),
        "ba": linear_bias(ks[3], action_dim, input_layer),
        "w1": xavier_normal(ks[4], 2 * input_layer, critic_hidden),
        "b1": linear_bias(ks[5], 2 * input_layer, critic_hidden),
        "w2": xavier_normal(ks[6], critic_hidden, critic_hidden),
        "b2": linear_bias(ks[7], critic_hidden, critic_hidden),
        "wq": xavier_normal(ks[8], critic_hidden, 1),
        "bq": linear_bias(ks[9], critic_hidden, 1),
    }

    D_in = state_dim + action_dim
    # Fused block-diagonal input projection, stored transposed (out, in).
    w_sa_t = jnp.zeros((2 * input_layer, D_in), jnp.float32)
    w_sa_t = w_sa_t.at[:input_layer, :state_dim].set(ref["ws"].T)
    w_sa_t = w_sa_t.at[input_layer:, state_dim:].set(ref["wa"].T)
    b_sa = jnp.concatenate([ref["bs"], ref["ba"]])[:, None]       # (2*IL, 1)

    kparams = {
        "w_sa_t": w_sa_t.astype(compute_dtype),                   # (2*IL, D_in)
        "b_sa": b_sa,                                             # f32
        "w1_t": ref["w1"].T.astype(compute_dtype),                # (H, 2*IL)
        "b1": ref["b1"][:, None],
        "w2_t": ref["w2"].T.astype(compute_dtype),                # (H, H)
        "b2": ref["b2"][:, None],
        "wq": ref["wq"].astype(compute_dtype),                    # (H, 1)
        "bq": ref["bq"][:, None],                                 # (1, 1)
    }
    return ref, kparams


def reference_forward(state, action, p):
    hs = jax.nn.relu(state @ p["ws"] + p["bs"])
    ha = jax.nn.relu(action @ p["wa"] + p["ba"])
    h = jnp.concatenate([hs, ha], axis=-1)
    h1 = jax.nn.relu(h @ p["w1"] + p["b1"])
    h2 = jax.nn.relu(h1 @ p["w2"] + p["b2"])
    return h2 @ p["wq"] + p["bq"]


if __name__ == "__main__":
    # config.INPUT_LAYER = 32, config.CRITIC_HIDDEN = 32
    B, STATE_DIM, ACTION_DIM = 8, 16, 8
    INPUT_LAYER, CRITIC_HIDDEN = 32, 32

    key = jax.random.PRNGKey(0)
    k_state, k_action, k_params = jax.random.split(key, 3)

    state = jax.random.normal(k_state, (B, STATE_DIM), dtype=jnp.float32)
    action = jax.random.normal(k_action, (B, ACTION_DIM), dtype=jnp.float32)
    ref_params, kparams = make_params(k_params, STATE_DIM, ACTION_DIM,
                                      INPUT_LAYER, CRITIC_HIDDEN)

    q = mpo_critic_forward(state, action, kparams)
    q = jax.block_until_ready(q)

    q_ref = reference_forward(state, action, ref_params)
    assert q.shape == (B, 1)
    max_err = float(jnp.max(jnp.abs(q - q_ref)))
    # Kernel uses bf16 MXU operands with f32 accumulation; reference is pure f32.
    assert jnp.allclose(q, q_ref, atol=5e-2, rtol=5e-2), f"max abs err {max_err}"

    print("KERNEL_OK")
</pallas_src>

<mosaic_0001>
module attributes {stable_mosaic.version = 11 : i64} {
  func.func @mpo_critic_kernel(%arg0: i32, %arg1: memref<24x128xf32, #tpu.memory_space<vmem>>, %arg2: memref<64x24xbf16, #tpu.memory_space<vmem>>, %arg3: memref<64x1xf32, #tpu.memory_space<vmem>>, %arg4: memref<32x64xbf16, #tpu.memory_space<vmem>>, %arg5: memref<32x1xf32, #tpu.memory_space<vmem>>, %arg6: memref<32x32xbf16, #tpu.memory_space<vmem>>, %arg7: memref<32x1xf32, #tpu.memory_space<vmem>>, %arg8: memref<32x1xbf16, #tpu.memory_space<vmem>>, %arg9: memref<1x1xf32, #tpu.memory_space<vmem>>, %arg10: memref<1x128xf32, #tpu.memory_space<vmem>>) attributes {dimension_semantics = [#tpu.dimension_semantics<parallel>], iteration_bounds = array<i64: 1>, scalar_prefetch = 0 : i64, scratch_operands = 0 : i64, tpu.core_type = #tpu.core_type<tc>, window_params = [{transform_indices = @transform_0, window_bounds = array<i64: 24, 128>}, {pipeline_mode = #tpu.pipeline_mode<synchronous>, transform_indices = @transform_1, window_bounds = array<i64: 64, 24>}, {pipeline_mode = #tpu.pipeline_mode<synchronous>, transform_indices = @transform_2, window_bounds = array<i64: 64, 1>}, {pipeline_mode = #tpu.pipeline_mode<synchronous>, transform_indices = @transform_3, window_bounds = array<i64: 32, 64>}, {pipeline_mode = #tpu.pipeline_mode<synchronous>, transform_indices = @transform_4, window_bounds = array<i64: 32, 1>}, {pipeline_mode = #tpu.pipeline_mode<synchronous>, transform_indices = @transform_5, window_bounds = array<i64: 32, 32>}, {pipeline_mode = #tpu.pipeline_mode<synchronous>, transform_indices = @transform_6, window_bounds = array<i64: 32, 1>}, {pipeline_mode = #tpu.pipeline_mode<synchronous>, transform_indices = @transform_7, window_bounds = array<i64: 32, 1>}, {pipeline_mode = #tpu.pipeline_mode<synchronous>, transform_indices = @transform_8, window_bounds = array<i64: 1, 1>}, {transform_indices = @transform_9, window_bounds = array<i64: 1, 128>}]} {
    %c0 = arith.constant 0 : index
    %c0_0 = arith.constant 0 : index
    %0 = vector.load %arg1[%c0, %c0_0] : memref<24x128xf32, #tpu.memory_space<vmem>>, vector<24x128xf32>
    %1 = arith.truncf %0 : vector<24x128xf32> to vector<24x128xbf16>
    %c0_1 = arith.constant 0 : index
    %c0_2 = arith.constant 0 : index
    %2 = vector.load %arg2[%c0_1, %c0_2] : memref<64x24xbf16, #tpu.memory_space<vmem>>, vector<64x24xbf16>
    %cst = arith.constant dense<0.000000e+00> : vector<64x128xf32>
    %3 = tpu.matmul %2, %1, %cst {dimension_numbers = #tpu.dot_dimension_numbers<[1], [0], [0], [1], [0, 0, 1, 1], [], []>} : vector<64x24xbf16>, vector<24x128xbf16>, vector<64x128xf32> -> vector<64x128xf32>
    %c0_3 = arith.constant 0 : index
    %c0_4 = arith.constant 0 : index
    %4 = vector.load %arg3[%c0_3, %c0_4] : memref<64x1xf32, #tpu.memory_space<vmem>>, vector<64x1xf32>
    %5 = vector.broadcast %4 : vector<64x1xf32> to vector<64x128xf32>
    %6 = arith.addf %3, %5 : vector<64x128xf32>
    %cst_5 = arith.constant 0.000000e+00 : f32
    %7 = vector.broadcast %cst_5 : f32 to vector<64x128xf32>
    %8 = arith.maximumf %6, %7 : vector<64x128xf32>
    %c0_6 = arith.constant 0 : index
    %c0_7 = arith.constant 0 : index
    %9 = vector.load %arg4[%c0_6, %c0_7] : memref<32x64xbf16, #tpu.memory_space<vmem>>, vector<32x64xbf16>
    %10 = arith.truncf %8 : vector<64x128xf32> to vector<64x128xbf16>
    %cst_8 = arith.constant dense<0.000000e+00> : vector<32x128xf32>
    %11 = tpu.matmul %9, %10, %cst_8 {dimension_numbers = #tpu.dot_dimension_numbers<[1], [0], [0], [1], [0, 0, 1, 1], [], []>} : vector<32x64xbf16>, vector<64x128xbf16>, vector<32x128xf32> -> vector<32x128xf32>
    %c0_9 = arith.constant 0 : index
    %c0_10 = arith.constant 0 : index
    %12 = vector.load %arg5[%c0_9, %c0_10] : memref<32x1xf32, #tpu.memory_space<vmem>>, vector<32x1xf32>
    %13 = vector.broadcast %12 : vector<32x1xf32> to vector<32x128xf32>
    %14 = arith.addf %11, %13 : vector<32x128xf32>
    %cst_11 = arith.constant 0.000000e+00 : f32
    %15 = vector.broadcast %cst_11 : f32 to vector<32x128xf32>
    %16 = arith.maximumf %14, %15 : vector<32x128xf32>
    %c0_12 = arith.constant 0 : index
    %c0_13 = arith.constant 0 : index
    %17 = vector.load %arg6[%c0_12, %c0_13] : memref<32x32xbf16, #tpu.memory_space<vmem>>, vector<32x32xbf16>
    %18 = arith.truncf %16 : vector<32x128xf32> to vector<32x128xbf16>
    %cst_14 = arith.constant dense<0.000000e+00> : vector<32x128xf32>
    %19 = tpu.matmul %17, %18, %cst_14 {dimension_numbers = #tpu.dot_dimension_numbers<[1], [0], [0], [1], [0, 0, 1, 1], [], []>} : vector<32x32xbf16>, vector<32x128xbf16>, vector<32x128xf32> -> vector<32x128xf32>
    %c0_15 = arith.constant 0 : index
    %c0_16 = arith.constant 0 : index
    %20 = vector.load %arg7[%c0_15, %c0_16] : memref<32x1xf32, #tpu.memory_space<vmem>>, vector<32x1xf32>
    %21 = vector.broadcast %20 : vector<32x1xf32> to vector<32x128xf32>
    %22 = arith.addf %19, %21 : vector<32x128xf32>
    %cst_17 = arith.constant 0.000000e+00 : f32
    %23 = vector.broadcast %cst_17 : f32 to vector<32x128xf32>
    %24 = arith.maximumf %22, %23 : vector<32x128xf32>
    %c0_18 = arith.constant 0 : index
    %c0_19 = arith.constant 0 : index
    %25 = vector.load %arg8[%c0_18, %c0_19] : memref<32x1xbf16, #tpu.memory_space<vmem>>, vector<32x1xbf16>
    %26 = arith.extf %25 : vector<32x1xbf16> to vector<32x1xf32>
    %27 = vector.broadcast %26 : vector<32x1xf32> to vector<32x128xf32>
    %28 = arith.mulf %24, %27 : vector<32x128xf32>
    %cst_20 = arith.constant dense<0.000000e+00> : vector<128xf32>
    %29 = vector.multi_reduction <add>, %28, %cst_20 [0] : vector<32x128xf32> to vector<128xf32>
    %30 = vector.shape_cast %29 : vector<128xf32> to vector<1x128xf32>
    %c0_21 = arith.constant 0 : index
    %c0_22 = arith.constant 0 : index
    %31 = vector.load %arg9[%c0_21, %c0_22] : memref<1x1xf32, #tpu.memory_space<vmem>>, vector<1x1xf32>
    %32 = vector.broadcast %31 : vector<1x1xf32> to vector<1x128xf32>
    %33 = arith.addf %30, %32 : vector<1x128xf32>
    %c0_23 = arith.constant 0 : index
    %c0_24 = arith.constant 0 : index
    %34 = vector.load %arg10[%c0_23, %c0_24] : memref<1x128xf32, #tpu.memory_space<vmem>>, vector<1x128xf32>
    tpu.vector_store %arg10[%c0_23, %c0_24], %33 {strides = array<i32>} : memref<1x128xf32, #tpu.memory_space<vmem>>, vector<1x128xf32>,
    return
  }
  func.func @transform_0(%arg0: i32) -> (i32, i32) {
    %c0_i32 = arith.constant 0 : i32
    %c0_i32_0 = arith.constant 0 : i32
    return %c0_i32, %arg0 : i32, i32
  }
  func.func @transform_1(%arg0: i32) -> (i32, i32) {
    %c0_i32 = arith.constant 0 : i32
    %c0_i32_0 = arith.constant 0 : i32
    %c0_i32_1 = arith.constant 0 : i32
    return %c0_i32, %c0_i32_0 : i32, i32
  }
  func.func @transform_2(%arg0: i32) -> (i32, i32) {
    %c0_i32 = arith.constant 0 : i32
    %c0_i32_0 = arith.constant 0 : i32
    %c0_i32_1 = arith.constant 0 : i32
    return %c0_i32, %c0_i32_0 : i32, i32
  }
  func.func @transform_3(%arg0: i32) -> (i32, i32) {
    %c0_i32 = arith.constant 0 : i32
    %c0_i32_0 = arith.constant 0 : i32
    %c0_i32_1 = arith.constant 0 : i32
    return %c0_i32, %c0_i32_0 : i32, i32
  }
  func.func @transform_4(%arg0: i32) -> (i32, i32) {
    %c0_i32 = arith.constant 0 : i32
    %c0_i32_0 = arith.constant 0 : i32
    %c0_i32_1 = arith.constant 0 : i32
    return %c0_i32, %c0_i32_0 : i32, i32
  }
  func.func @transform_5(%arg0: i32) -> (i32, i32) {
    %c0_i32 = arith.constant 0 : i32
    %c0_i32_0 = arith.constant 0 : i32
    %c0_i32_1 = arith.constant 0 : i32
    return %c0_i32, %c0_i32_0 : i32, i32
  }
  func.func @transform_6(%arg0: i32) -> (i32, i32) {
    %c0_i32 = arith.constant 0 : i32
    %c0_i32_0 = arith.constant 0 : i32
    %c0_i32_1 = arith.constant 0 : i32
    return %c0_i32, %c0_i32_0 : i32, i32
  }
  func.func @transform_7(%arg0: i32) -> (i32, i32) {
    %c0_i32 = arith.constant 0 : i32
    %c0_i32_0 = arith.constant 0 : i32
    %c0_i32_1 = arith.constant 0 : i32
    return %c0_i32, %c0_i32_0 : i32, i32
  }
  func.func @transform_8(%arg0: i32) -> (i32, i32) {
    %c0_i32 = arith.constant 0 : i32
    %c0_i32_0 = arith.constant 0 : i32
    %c0_i32_1 = arith.constant 0 : i32
    return %c0_i32, %c0_i32_0 : i32, i32
  }
  func.func @transform_9(%arg0: i32) -> (i32, i32) {
    %c0_i32 = arith.constant 0 : i32
    %c0_i32_0 = arith.constant 0 : i32
    return %c0_i32, %arg0 : i32, i32
  }
}

</mosaic_0001>

<llo_original>
// kernel: tpu_custom_call.1
$region0: #{tpu_custom_call.1}
  #allocation0 [shape = 'u32[]', space=smem, size = 0x4, offset = 0x4, fixed_abs, tag = 'smem constant byte address 0x4 - core index']
  #allocation1 [shape = 'u32[144,128]{1,0:T(1,128)}', space=vmem, size = 0x12000, scoped, tag = 'internal scratch']
  #allocation2 [shape = 'f32[1,1]{1,0:T(1,128)S(1)}', space=vmem, size = 0x200, scoped, tag = 'scoped memory for tpu_custom_call.1']
  %s0 = inlined_call_operand.vmem [shape: f32[24,128], index: 0, kind: input, shape index: {}]
  %s1 = inlined_call_operand.vmem [shape: bf16[64,24], index: 1, kind: input, shape index: {}]
  %s2 = inlined_call_operand.vmem [shape: f32[64,1], index: 2, kind: input, shape index: {}]
  %s3 = inlined_call_operand.vmem [shape: bf16[32,64], index: 3, kind: input, shape index: {}]
  %s4 = inlined_call_operand.vmem [shape: f32[32,1], index: 4, kind: input, shape index: {}]
  %s5 = inlined_call_operand.vmem [shape: bf16[32,32], index: 5, kind: input, shape index: {}]
  %s6 = inlined_call_operand.vmem [shape: f32[32,1], index: 6, kind: input, shape index: {}]
  %s7 = inlined_call_operand.vmem [shape: bf16[32,1], index: 7, kind: input, shape index: {}]
  %s8 = inlined_call_operand.<no memory space> [shape: f32[1,1], index: 8, kind: input, shape index: {}]
  %s9 = inlined_call_operand.hbm [shape: f32[1,128], index: 9, kind: output, shape index: {}]
  %s10 = sld [smem:[#allocation0]]
  $region46: #{tpu_custom_call.1} parent=0
    _
  %s12 = ssub.s32 1, %s10
  %s13 = scalar_select 0, %s12, %s10
  %v14 = vstv %s8
  %15 = vst [vmem:[#allocation2] sm:$0x1] %v14
  $region1: #{tpu_custom_call.1} parent=0
    #allocation3 [shape = 'u8[512]{0}', space=vmem, size = 0x400, scoped, tag = 'output window, operand 0, single buffered']
    #allocation4 [shape = 's32[1]{0}', space=sflag, size = 0x4, scoped, tag = 'scoped memory for tpu_custom_call.1']
    %16 = vsyncpa [#allocation4], 0
    // Predicated region
    $region2: #{tpu_custom_call.1} parent=1 // pred_check
      _
    $region3: #{tpu_custom_call.1} parent=1 // pred_check_branch
      %18 = sbr.rel (0) target = $region5
    $region4: #{tpu_custom_call.1} parent=1 // pred_region
      _
    $region5: #{tpu_custom_call.1} parent=1 // pred_fallthru
      _
    // Predicated region
    $region6: #{tpu_custom_call.1} parent=1 // pred_check
      _
    $region7: #{tpu_custom_call.1} parent=1 // pred_check_branch
      %20 = sbr.rel (0) target = $region9
    $region8: #{tpu_custom_call.1} parent=1 // pred_region
      _
    $region9: #{tpu_custom_call.1} parent=1 // pred_fallthru
      _
    // Predicated region
    $region10: #{tpu_custom_call.1} parent=1 // pred_check
      _
    $region11: #{tpu_custom_call.1} parent=1 // pred_check_branch
      %22 = sbr.rel (0) target = $region13
    $region12: #{tpu_custom_call.1} parent=1 // pred_region
      _
    $region13: #{tpu_custom_call.1} parent=1 // pred_fallthru
      _
    // Predicated region
    $region14: #{tpu_custom_call.1} parent=1 // pred_check
      _
    $region15: #{tpu_custom_call.1} parent=1 // pred_check_branch
      %24 = sbr.rel (0) target = $region17
    $region16: #{tpu_custom_call.1} parent=1 // pred_region
      _
    $region17: #{tpu_custom_call.1} parent=1 // pred_fallthru
      _
    // Predicated region
    $region18: #{tpu_custom_call.1} parent=1 // pred_check
      _
    $region19: #{tpu_custom_call.1} parent=1 // pred_check_branch
      %26 = sbr.rel (0) target = $region21
    $region20: #{tpu_custom_call.1} parent=1 // pred_region
      _
    $region21: #{tpu_custom_call.1} parent=1 // pred_fallthru
      _
    // Predicated region
    $region22: #{tpu_custom_call.1} parent=1 // pred_check
      _
    $region23: #{tpu_custom_call.1} parent=1 // pred_check_branch
      %28 = sbr.rel (0) target = $region25
    $region24: #{tpu_custom_call.1} parent=1 // pred_region
      _
    $region25: #{tpu_custom_call.1} parent=1 // pred_fallthru
      _
    // Predicated region
    $region26: #{tpu_custom_call.1} parent=1 // pred_check
      _
    $region27: #{tpu_custom_call.1} parent=1 // pred_check_branch
      %30 = sbr.rel (0) target = $region29
    $region28: #{tpu_custom_call.1} parent=1 // pred_region
      _
    $region29: #{tpu_custom_call.1} parent=1 // pred_fallthru
      _
    // Predicated region
    $region30: #{tpu_custom_call.1} parent=1 // pred_check
      _
    $region31: #{tpu_custom_call.1} parent=1 // pred_check_branch
      %32 = sbr.rel (0) target = $region33
    $region32: #{tpu_custom_call.1} parent=1 // pred_region
      _
    $region33: #{tpu_custom_call.1} parent=1 // pred_fallthru
      _
    // Predicated region
    $region34: #{tpu_custom_call.1} parent=1 // pred_check
      _
    $region35: #{tpu_custom_call.1} parent=1 // pred_check_branch
      %34 = sbr.rel (0) target = $region37
    $region36: #{tpu_custom_call.1} parent=1 // pred_region
      _
    $region37: #{tpu_custom_call.1} parent=1 // pred_fallthru
      _
    %v36 = vld [vmem:[%s0] sm:$0xff]
    %v37 = vld [vmem:[%s0 + $0x8] sm:$0xff]
    %v38 = vld [vmem:[%s0 + $0x10] sm:$0xff]
    %v39 = vpack.c.bf16 %v37, %v36
    %v40 = vpack.c.bf16 %v38, %v38
    %v41 = vld [vmem:[%s1] sm:$0xf]
    %v42 = vld [vmem:[%s1 + $0x4] sm:$0xf]
    %v43 = vld [vmem:[%s1 + $0x8] sm:$0xf]
    %v44 = vld [vmem:[%s1 + $0xc] sm:$0xf]
    %v45 = vld [vmem:[%s1 + $0x10] sm:$0xf]
    %v46 = vld [vmem:[%s1 + $0x14] sm:$0xf]
    %v47 = vld [vmem:[%s1 + $0x18] sm:$0xf]
    %v48 = vld [vmem:[%s1 + $0x1c] sm:$0xf]
    %v49 = vld [vmem:[%s2] sm:$0xff]
    %v50 = vld [vmem:[%s2 + $0x8] sm:$0xff]
    %v51 = vld [vmem:[%s2 + $0x10] sm:$0xff]
    %v52 = vld [vmem:[%s2 + $0x18] sm:$0xff]
    %v53 = vld [vmem:[%s2 + $0x20] sm:$0xff]
    %v54 = vld [vmem:[%s2 + $0x28] sm:$0xff]
    %v55 = vld [vmem:[%s2 + $0x30] sm:$0xff]
    %v56 = vld [vmem:[%s2 + $0x38] sm:$0xff]
    %58 = vset.pattern.permute.xlu0 0
    %59 = vperm.xlu0 %58, %v49
    %v60 = vpop.permute.xlu0 %59
    %63 = vset.pattern.permute.xlu0 0
    %64 = vperm.xlu0 %63, %v50
    %v65 = vpop.permute.xlu0 %64
    %68 = vset.pattern.permute.xlu0 0
    %69 = vperm.xlu0 %68, %v51
    %v70 = vpop.permute.xlu0 %69
    %73 = vset.pattern.permute.xlu0 0
    %74 = vperm.xlu0 %73, %v52
    %v75 = vpop.permute.xlu0 %74
    %78 = vset.pattern.permute.xlu0 0
    %79 = vperm.xlu0 %78, %v53
    %v80 = vpop.permute.xlu0 %79
    %83 = vset.pattern.permute.xlu0 0
    %84 = vperm.xlu0 %83, %v54
    %v85 = vpop.permute.xlu0 %84
    %88 = vset.pattern.permute.xlu0 0
    %89 = vperm.xlu0 %88, %v55
    %v90 = vpop.permute.xlu0 %89
    %93 = vset.pattern.permute.xlu0 0
    %94 = vperm.xlu0 %93, %v56
    %v95 = vpop.permute.xlu0 %94
    %v105 = vunpack.c.l.b16 %v41
    %v106 = vunpack.c.l.b16 %v42
    %v107 = vunpack.c.l.b16 %v43
    %v108 = vunpack.c.l.b16 %v44
    %v109 = vunpack.c.l.b16 %v45
    %v110 = vunpack.c.l.b16 %v46
    %v111 = vunpack.c.l.b16 %v47
    %v112 = vunpack.c.l.b16 %v48
    %v113 = vpack.c.b16 %v106, %v105
    %v114 = vpack.c.b16 %v108, %v107
    %v115 = vpack.c.b16 %v110, %v109
    %v116 = vpack.c.b16 %v112, %v111
    %vm117 = vcmask 195584
    %v119 = vsel %vm117, %v113, 0
    %v122 = vsel %vm117, %v114, 0
    %v125 = vsel %vm117, %v115, 0
    %v128 = vsel %vm117, %v116, 0
    %vm130 = vcmask 1043456
    %v132 = vsel %vm130, %v40, 0
    %134 = vmatprep.subr.bf16.mxu0 0
    %135 = vmatpush1.bf16.msra.mxu0 %v39
    %136 = vmatprep.subr.bf16.mxu0 0
    %137 = vmatpush1.bf16.msra.mxu0 %v132
    %138 = vmatprep.subr.bf16.mxu0 0
    %139 = vmatpush1.bf16.msra.mxu0 0
    %140 = vmatprep.subr.bf16.mxu0 0
    %141 = vmatpush1.bf16.msra.mxu0 0
    %142 = vmatprep.subr.bf16.mxu0 0
    %143 = vmatpush1.bf16.msra.mxu0 0
    %144 = vmatprep.subr.bf16.mxu0 0
    %145 = vmatpush1.bf16.msra.mxu0 0
    %146 = vmatprep.subr.bf16.mxu0 0
    %147 = vmatpush1.bf16.msra.mxu0 0
    %148 = vmatprep.subr.bf16.mxu0 0
    %149 = vmatpush1.bf16.msra.mxu0 0
    %150 = vmatprep.subr.bf16.mxu0 0
    %151 = vmatpush1.bf16.msra.mxu0 0
    %152 = vmatprep.subr.bf16.mxu0 0
    %153 = vmatpush1.bf16.msra.mxu0 0
    %154 = vmatprep.subr.bf16.mxu0 0
    %155 = vmatpush1.bf16.msra.mxu0 0
    %156 = vmatprep.subr.bf16.mxu0 0
    %157 = vmatpush1.bf16.msra.mxu0 0
    %158 = vmatprep.subr.bf16.mxu0 0
    %159 = vmatpush1.bf16.msra.mxu0 0
    %160 = vmatprep.subr.bf16.mxu0 0
    %161 = vmatpush1.bf16.msra.mxu0 0
    %162 = vmatprep.subr.bf16.mxu0 0
    %163 = vmatpush1.bf16.msra.mxu0 0
    %164 = vmatprep.subr.bf16.mxu0 0
    %165 = vmatpush1.bf16.msra.mxu0 0
    %166 = vmatprep.mubr.bf16.mxu0 0
    %167 = vmatmul.mubr.bf16.gmra.mrb[0].mxu0 %v119
    %v168 = vpop.f32.mrb[0].mxu0
    %v169 = vadd.f32 %v60, %v168
    %v170 = vpop.f32.mrb[0].mxu0
    %v171 = vpop.f32.mrb[0].mxu0
    %v172 = vadd.f32 %v65, %v171
    %v173 = vpop.f32.mrb[0].mxu0
    %174 = vmatprep.mubr.bf16.mxu0 0
    %175 = vmatmul.mubr.bf16.gmra.mrb[0].mxu0 %v122
    %v176 = vpop.f32.mrb[0].mxu0
    %v177 = vadd.f32 %v70, %v176
    %v178 = vpop.f32.mrb[0].mxu0
    %v179 = vpop.f32.mrb[0].mxu0
    %v180 = vadd.f32 %v75, %v179
    %v181 = vpop.f32.mrb[0].mxu0
    %182 = vmatprep.mubr.bf16.mxu0 0
    %183 = vmatmul.mubr.bf16.gmra.mrb[0].mxu0 %v125
    %v184 = vpop.f32.mrb[0].mxu0
    %v185 = vadd.f32 %v80, %v184
    %v186 = vpop.f32.mrb[0].mxu0
    %v187 = vpop.f32.mrb[0].mxu0
    %v188 = vadd.f32 %v85, %v187
    %v189 = vpop.f32.mrb[0].mxu0
    %190 = vmatprep.mubr.bf16.mxu0 0
    %191 = vmatmul.mubr.bf16.gmra.mrb[0].mxu0 %v128
    %v192 = vpop.f32.mrb[0].mxu0
    %v193 = vadd.f32 %v90, %v192
    %v194 = vpop.f32.mrb[0].mxu0
    %v195 = vpop.f32.mrb[0].mxu0
    %v196 = vadd.f32 %v95, %v195
    %v197 = vpop.f32.mrb[0].mxu0
    %198 = vdwg.mxu0
    %v199 = vmax.f32 %v169, 0.0
    %v200 = vmax.f32 %v172, 0.0
    %v201 = vmax.f32 %v177, 0.0
    %v202 = vmax.f32 %v180, 0.0
    %v203 = vmax.f32 %v185, 0.0
    %v204 = vmax.f32 %v188, 0.0
    %v205 = vmax.f32 %v193, 0.0
    %v206 = vmax.f32 %v196, 0.0
    %v207 = vld [vmem:[%s3] sm:$0xf]
    %v208 = vld [vmem:[%s3 + $0x4] sm:$0xf]
    %v209 = vld [vmem:[%s3 + $0x8] sm:$0xf]
    %v210 = vld [vmem:[%s3 + $0xc] sm:$0xf]
    %v211 = vpack.c.bf16 %v200, %v199
    %v212 = vpack.c.bf16 %v202, %v201
    %v213 = vpack.c.bf16 %v204, %v203
    %v214 = vpack.c.bf16 %v206, %v205
    %v215 = vld [vmem:[%s4] sm:$0xff]
    %v216 = vld [vmem:[%s4 + $0x8] sm:$0xff]
    %v217 = vld [vmem:[%s4 + $0x10] sm:$0xff]
    %v218 = vld [vmem:[%s4 + $0x18] sm:$0xff]
    %220 = vset.pattern.permute.xlu0 0
    %221 = vperm.xlu0 %220, %v215
    %v222 = vpop.permute.xlu0 %221
    %225 = vset.pattern.permute.xlu0 0
    %226 = vperm.xlu0 %225, %v216
    %v227 = vpop.permute.xlu0 %226
    %230 = vset.pattern.permute.xlu0 0
    %231 = vperm.xlu0 %230, %v217
    %v232 = vpop.permute.xlu0 %231
    %235 = vset.pattern.permute.xlu0 0
    %236 = vperm.xlu0 %235, %v218
    %v237 = vpop.permute.xlu0 %236
    %v243 = vunpack.c.l.b16 %v207
    %v244 = vunpack.c.l.b16 %v208
    %v245 = vunpack.c.l.b16 %v209
    %v246 = vunpack.c.l.b16 %v210
    %v247 = vpack.c.b16 %v244, %v243
    %v248 = vpack.c.b16 %v246, %v245
    %vm249 = vcmask 523264
    %v251 = vsel %vm249, %v247, 0
    %v254 = vsel %vm249, %v248, 0
    %256 = vmatprep.subr.bf16.mxu0 0
    %257 = vmatpush1.bf16.msra.mxu0 %v211
    %258 = vmatprep.subr.bf16.mxu0 0
    %259 = vmatpush1.bf16.msra.mxu0 %v212
    %260 = vmatprep.subr.bf16.mxu0 0
    %261 = vmatpush1.bf16.msra.mxu0 %v213
    %262 = vmatprep.subr.bf16.mxu0 0
    %263 = vmatpush1.bf16.msra.mxu0 %v214
    %264 = vmatprep.subr.bf16.mxu0 0
    %265 = vmatpush1.bf16.msra.mxu0 0
    %266 = vmatprep.subr.bf16.mxu0 0
    %267 = vmatpush1.bf16.msra.mxu0 0
    %268 = vmatprep.subr.bf16.mxu0 0
    %269 = vmatpush1.bf16.msra.mxu0 0
    %270 = vmatprep.subr.bf16.mxu0 0
    %271 = vmatpush1.bf16.msra.mxu0 0
    %272 = vmatprep.subr.bf16.mxu0 0
    %273 = vmatpush1.bf16.msra.mxu0 0
    %274 = vmatprep.subr.bf16.mxu0 0
    %275 = vmatpush1.bf16.msra.mxu0 0
    %276 = vmatprep.subr.bf16.mxu0 0
    %277 = vmatpush1.bf16.msra.mxu0 0
    %278 = vmatprep.subr.bf16.mxu0 0
    %279 = vmatpush1.bf16.msra.mxu0 0
    %280 = vmatprep.subr.bf16.mxu0 0
    %281 = vmatpush1.bf16.msra.mxu0 0
    %282 = vmatprep.subr.bf16.mxu0 0
    %283 = vmatpush1.bf16.msra.mxu0 0
    %284 = vmatprep.subr.bf16.mxu0 0
    %285 = vmatpush1.bf16.msra.mxu0 0
    %286 = vmatprep.subr.bf16.mxu0 0
    %287 = vmatpush1.bf16.msra.mxu0 0
    %288 = vmatprep.mubr.bf16.mxu0 0
    %289 = vmatmul.mubr.bf16.gmra.mrb[0].mxu0 %v251
    %v290 = vpop.f32.mrb[0].mxu0
    %v291 = vadd.f32 %v222, %v290
    %v292 = vpop.f32.mrb[0].mxu0
    %v293 = vpop.f32.mrb[0].mxu0
    %v294 = vadd.f32 %v227, %v293
    %v295 = vpop.f32.mrb[0].mxu0
    %296 = vmatprep.mubr.bf16.mxu0 0
    %297 = vmatmul.mubr.bf16.gmra.mrb[0].mxu0 %v254
    %v298 = vpop.f32.mrb[0].mxu0
    %v299 = vadd.f32 %v232, %v298
    %v300 = vpop.f32.mrb[0].mxu0
    %v301 = vpop.f32.mrb[0].mxu0
    %v302 = vadd.f32 %v237, %v301
    %v303 = vpop.f32.mrb[0].mxu0
    %304 = vdwg.mxu0
    %v305 = vmax.f32 %v291, 0.0
    %v306 = vmax.f32 %v294, 0.0
    %v307 = vmax.f32 %v299, 0.0
    %v308 = vmax.f32 %v302, 0.0
    %v309 = vld [vmem:[%s5] sm:$0xf]
    %v310 = vld [vmem:[%s5 + $0x4] sm:$0xf]
    %v311 = vld [vmem:[%s5 + $0x8] sm:$0xf]
    %v312 = vld [vmem:[%s5 + $0xc] sm:$0xf]
    %v313 = vpack.c.bf16 %v306, %v305
    %v314 = vpack.c.bf16 %v308, %v307
    %v315 = vld [vmem:[%s6] sm:$0xff]
    %v316 = vld [vmem:[%s6 + $0x8] sm:$0xff]
    %v317 = vld [vmem:[%s6 + $0x10] sm:$0xff]
    %v318 = vld [vmem:[%s6 + $0x18] sm:$0xff]
    %320 = vset.pattern.permute.xlu0 0
    %321 = vperm.xlu0 %320, %v315
    %v322 = vpop.permute.xlu0 %321
    %325 = vset.pattern.permute.xlu0 0
    %326 = vperm.xlu0 %325, %v316
    %v327 = vpop.permute.xlu0 %326
    %330 = vset.pattern.permute.xlu0 0
    %331 = vperm.xlu0 %330, %v317
    %v332 = vpop.permute.xlu0 %331
    %335 = vset.pattern.permute.xlu0 0
    %336 = vperm.xlu0 %335, %v318
    %v337 = vpop.permute.xlu0 %336
    %v343 = vunpack.c.l.b16 %v309
    %v344 = vunpack.c.l.b16 %v310
    %v345 = vunpack.c.l.b16 %v311
    %v346 = vunpack.c.l.b16 %v312
    %v347 = vpack.c.b16 %v344, %v343
    %v348 = vpack.c.b16 %v346, %v345
    %vm349 = vcmask 261120
    %v351 = vsel %vm349, %v347, 0
    %v354 = vsel %vm349, %v348, 0
    %356 = vmatprep.subr.bf16.mxu0 0
    %357 = vmatpush1.bf16.msra.mxu0 %v313
    %358 = vmatprep.subr.bf16.mxu0 0
    %359 = vmatpush1.bf16.msra.mxu0 %v314
    %360 = vmatprep.subr.bf16.mxu0 0
    %361 = vmatpush1.bf16.msra.mxu0 0
    %362 = vmatprep.subr.bf16.mxu0 0
    %363 = vmatpush1.bf16.msra.mxu0 0
    %364 = vmatprep.subr.bf16.mxu0 0
    %365 = vmatpush1.bf16.msra.mxu0 0
    %366 = vmatprep.subr.bf16.mxu0 0
    %367 = vmatpush1.bf16.msra.mxu0 0
    %368 = vmatprep.subr.bf16.mxu0 0
    %369 = vmatpush1.bf16.msra.mxu0 0
    %370 = vmatprep.subr.bf16.mxu0 0
    %371 = vmatpush1.bf16.msra.mxu0 0
    %372 = vmatprep.subr.bf16.mxu0 0
    %373 = vmatpush1.bf16.msra.mxu0 0
    %374 = vmatprep.subr.bf16.mxu0 0
    %375 = vmatpush1.bf16.msra.mxu0 0
    %376 = vmatprep.subr.bf16.mxu0 0
    %377 = vmatpush1.bf16.msra.mxu0 0
    %378 = vmatprep.subr.bf16.mxu0 0
    %379 = vmatpush1.bf16.msra.mxu0 0
    %380 = vmatprep.subr.bf16.mxu0 0
    %381 = vmatpush1.bf16.msra.mxu0 0
    %382 = vmatprep.subr.bf16.mxu0 0
    %383 = vmatpush1.bf16.msra.mxu0 0
    %384 = vmatprep.subr.bf16.mxu0 0
    %385 = vmatpush1.bf16.msra.mxu0 0
    %386 = vmatprep.subr.bf16.mxu0 0
    %387 = vmatpush1.bf16.msra.mxu0 0
    %388 = vmatprep.mubr.bf16.mxu0 0
    %389 = vmatmul.mubr.bf16.gmra.mrb[0].mxu0 %v351
    %v390 = vpop.f32.mrb[0].mxu0
    %v391 = vadd.f32 %v322, %v390
    %v392 = vpop.f32.mrb[0].mxu0
    %v393 = vpop.f32.mrb[0].mxu0
    %v394 = vadd.f32 %v327, %v393
    %v395 = vpop.f32.mrb[0].mxu0
    %396 = vmatprep.mubr.bf16.mxu0 0
    %397 = vmatmul.mubr.bf16.gmra.mrb[0].mxu0 %v354
    %v398 = vpop.f32.mrb[0].mxu0
    %v399 = vadd.f32 %v332, %v398
    %v400 = vpop.f32.mrb[0].mxu0
    %v401 = vpop.f32.mrb[0].mxu0
    %v402 = vadd.f32 %v337, %v401
    %v403 = vpop.f32.mrb[0].mxu0
    %404 = vdwg.mxu0
    %v405 = vmax.f32 %v391, 0.0
    %v406 = vmax.f32 %v394, 0.0
    %v407 = vmax.f32 %v399, 0.0
    %v408 = vmax.f32 %v402, 0.0
    %v409 = vld [vmem:[%s7] sm:$0xf]
    %v410 = vld [vmem:[%s7 + $0x4] sm:$0xf]
    %v411 = vld [vmem:[%s7 + $0x8] sm:$0xf]
    %v412 = vld [vmem:[%s7 + $0xc] sm:$0xf]
    %v413 = vunpack.c.l.bf16 %v409
    %v414 = vunpack.c.l.bf16 %v410
    %v415 = vunpack.c.l.bf16 %v411
    %v416 = vunpack.c.l.bf16 %v412
    %418 = vset.pattern.permute.xlu0 0
    %419 = vperm.xlu0 %418, %v413
    %v420 = vpop.permute.xlu0 %419
    %423 = vset.pattern.permute.xlu0 0
    %424 = vperm.xlu0 %423, %v414
    %v425 = vpop.permute.xlu0 %424
    %428 = vset.pattern.permute.xlu0 0
    %429 = vperm.xlu0 %428, %v415
    %v430 = vpop.permute.xlu0 %429
    %433 = vset.pattern.permute.xlu0 0
    %434 = vperm.xlu0 %433, %v416
    %v435 = vpop.permute.xlu0 %434
    %v437 = vmul.f32 %v405, %v420
    %v438 = vmul.f32 %v406, %v425
    %v439 = vmul.f32 %v407, %v430
    %v440 = vmul.f32 %v408, %v435
    %v441 = vadd.f32 %v437, %v438
    %v442 = vadd.f32 %v441, %v439
    %v443 = vadd.f32 %v442, %v440
    %v444 = vrot.slane %v443, 4
    %v445 = vadd.f32 %v443, %v444
    %v446 = vrot.slane %v445, 2
    %v447 = vadd.f32 %v445, %v446
    %v448 = vrot.slane %v447, 1
    %v449 = vadd.f32 %v447, %v448
    %v450 = vld [vmem:[#allocation2] sm:$0x1]
    %452 = vset.pattern.permute.xlu0 0
    %453 = vperm.xlu0 %452, %v450
    %v454 = vpop.permute.xlu0 %453
    %v456 = vlaneseq
    %v457 = vshrl.u32 %v456, 7
    %v458 = vsub.s32 0, %v457
    %v459 = vrot.slane %v454, %v458
    %v460 = vadd.f32 %v449, %v459
    %461 = vst [vmem:[#allocation3] sm:$0x1] %v460
    // Predicated region
    $region38: #{tpu_custom_call.1} parent=1 // pred_check
      _
    $region39: #{tpu_custom_call.1} parent=1 // pred_check_branch
      %463 = sbr.rel (0) target = $region41
    $region40: #{tpu_custom_call.1} parent=1 // pred_region
      %s465 = ssub.s32 16, 16
      %466 = vsyncadd [#allocation4], %s465
      %s468 = sshll.u32 [#allocation3], 4
      %s469 = int_to_ptr.vmem [resolvable:$true] %s468
      %471 = dma.vmem_to_hbm [thread:$0]  %s469, 16, %s9, [#allocation4]
    $region41: #{tpu_custom_call.1} parent=1 // pred_fallthru
      _
    // Predicated region
    $region42: #{tpu_custom_call.1} parent=1 // pred_check
      _
    $region43: #{tpu_custom_call.1} parent=1 // pred_check_branch
      %473 = sbr.rel (0) target = $region45
    $region44: #{tpu_custom_call.1} parent=1 // pred_region
      %474 = dma.done [#allocation4], 16
    $region45: #{tpu_custom_call.1} parent=1 // pred_fallthru
      _
    %475 = vsyncpa [#allocation4], 1

</llo_original>
